<compile_context>
chip_gen: v6e
topology: v6e:2x2x1
jax: 0.10.0
libtpu: 0.0.40
codegen_flags: <defaults>
</compile_context>

<pallas_src>
import math

import jax
import jax.numpy as jnp
import numpy as np
from jax.experimental import pallas as pl
from jax.experimental.pallas import tpu as pltpu


def _cond_embed_kernel(
    t_ref,        # (TB, 1)      f32  : treatments (padded batch tile)
    w2_ref,       # (1, E//2)    f32  : GaussianFourierProjection.W * 2*pi
    lw_sin_ref,   # (E//2, E)    bf16 : treatment Linear weight, sin half
    lw_cos_ref,   # (E//2, E)    bf16 : treatment Linear weight, cos half
    lin_b_ref,    # (1, E)       f32  : treatment Linear bias
    out_wt_ref,   # (E, E)       bf16 : output Linear weight, treatment half
    x_ref,        # (TB, Dimg)   bf16 : flattened image
    w_io_ref,     # (Dimg, E)    bf16 : img_w @ out_w[E:]  (folded offline)
    b_fused_ref,  # (1, E)       f32  : out_b + img_b @ out_w[E:]
    o_ref,        # (TB, E)      f32  : output embedding
):
    # ---- Gaussian Fourier features (2*pi pre-folded into w2) ----
    x_proj = t_ref[...] * w2_ref[...]                       # (TB, E//2) f32
    s = jnp.sin(x_proj)
    c = jnp.cos(x_proj)

    # ---- treatment Linear, concat-free:
    #   cat([sin, cos], -1) @ lin_w == sin @ lin_w[:E//2] + cos @ lin_w[E//2:]
    treat = (
        jnp.dot(s.astype(jnp.bfloat16), lw_sin_ref[...],
                preferred_element_type=jnp.float32)
        + jnp.dot(c.astype(jnp.bfloat16), lw_cos_ref[...],
                  preferred_element_type=jnp.float32)
        + lin_b_ref[...])                                    # (TB, E)
    treat = treat * jax.nn.sigmoid(treat)                    # swish, f32

    # ---- output Linear with the image path folded offline:
    #   cat([treat, img]) @ out_w + out_b
    #     == treat @ out_w[:E] + (x @ img_w + img_b) @ out_w[E:] + out_b
    #     == treat @ out_w_t   +  x @ W_io                       + b_fused
    out = (
        jnp.dot(treat.astype(jnp.bfloat16), out_wt_ref[...],
                preferred_element_type=jnp.float32)
        + jnp.dot(x_ref[...], w_io_ref[...],
                  preferred_element_type=jnp.float32)
        + b_fused_ref[...])                                   # (TB, E)
    o_ref[...] = out.astype(o_ref.dtype)


def prepare_params(params):
    """One-time parameter folding (call once, not per forward)."""
    E = params["lin_w"].shape[0]
    half = E // 2
    out_w_i = params["out_w"][E:, :]                          # (E, E) image half
    return {
        "w2": (params["W"] * (2.0 * math.pi)).astype(jnp.float32),
        "lw_sin": params["lin_w"][:half, :].astype(jnp.bfloat16),
        "lw_cos": params["lin_w"][half:, :].astype(jnp.bfloat16),
        "lin_b": params["lin_b"].astype(jnp.float32),
        "out_wt": params["out_w"][:E, :].astype(jnp.bfloat16),
        "w_io": (params["img_w"] @ out_w_i).astype(jnp.bfloat16),   # (Dimg, E)
        "b_fused": (params["out_b"] + params["img_b"] @ out_w_i).astype(jnp.float32),
    }


def conditional_embedder(X, T, prepped):
    """X: (B, C, H, W), T: (B,). Returns (B, embed_dim) float32."""
    B = X.shape[0]
    E = prepped["out_wt"].shape[0]
    x_flat = X.reshape(B, -1).astype(jnp.bfloat16)            # (B, Dimg)
    Dimg = x_flat.shape[1]
    t2d = T.astype(jnp.float32).reshape(B, 1)                 # (B, 1)

    # Batch tile: 128 rows fill MXU M when batched; pad small B up to a
    # sublane multiple so (B, *) blocks are not implicitly padded per-call.
    tb = 128 if B >= 128 else 8 * pl.cdiv(B, 8)
    nb = pl.cdiv(B, tb)
    b_pad = nb * tb
    if b_pad != B:
        x_flat = jnp.pad(x_flat, ((0, b_pad - B), (0, 0)))
        t2d = jnp.pad(t2d, ((0, b_pad - B), (0, 0)))

    def batch_spec(last):
        return pl.BlockSpec((tb, last), lambda i: (i, 0))

    def full_spec(arr):
        return pl.BlockSpec(arr.shape, lambda i: (0, 0))

    operands = (t2d, prepped["w2"], prepped["lw_sin"], prepped["lw_cos"],
                prepped["lin_b"], prepped["out_wt"], x_flat,
                prepped["w_io"], prepped["b_fused"])
    in_specs = [
        batch_spec(1),                      # t
        full_spec(prepped["w2"]),
        full_spec(prepped["lw_sin"]),
        full_spec(prepped["lw_cos"]),
        full_spec(prepped["lin_b"]),
        full_spec(prepped["out_wt"]),
        batch_spec(Dimg),                   # x
        full_spec(prepped["w_io"]),
        full_spec(prepped["b_fused"]),
    ]

    out = pl.pallas_call(
        _cond_embed_kernel,
        out_shape=jax.ShapeDtypeStruct((b_pad, E), jnp.float32),
        grid=(nb,),
        in_specs=in_specs,
        out_specs=pl.BlockSpec((tb, E), lambda i: (i, 0)),
        compiler_params=pltpu.CompilerParams(
            dimension_semantics=("parallel",)),   # batch tiles split across TCs (v7x)
    )(*operands)
    return out[:B]


def init_params(key, embed_dim, in_channels, conditional_len, scale=30.0):
    """Deterministic synthetic parameters matching the module's shapes (f32)."""
    d_img = in_channels * conditional_len * conditional_len
    ks = jax.random.split(key, 7)
    return {
        # GaussianFourierProjection.W : (embed_dim // 2,) * scale
        "W": jax.random.normal(ks[0], (1, embed_dim // 2), jnp.float32) * scale,
        # Linear(embed_dim, embed_dim) stored pre-transposed as (in, out)
        "lin_w": jax.random.normal(ks[1], (embed_dim, embed_dim), jnp.float32)
                 * (1.0 / math.sqrt(embed_dim)),
        "lin_b": jax.random.normal(ks[2], (1, embed_dim), jnp.float32) * 0.01,
        # ImageEmbedder (approx): Linear(C*H*W, embed_dim), (in, out)
        "img_w": jax.random.normal(ks[3], (d_img, embed_dim), jnp.float32)
                 * (1.0 / math.sqrt(d_img)),
        "img_b": jax.random.normal(ks[4], (1, embed_dim), jnp.float32) * 0.01,
        # output Linear(2*embed_dim, embed_dim), (in, out)
        "out_w": jax.random.normal(ks[5], (2 * embed_dim, embed_dim), jnp.float32)
                 * (1.0 / math.sqrt(2 * embed_dim)),
        "out_b": jax.random.normal(ks[6], (1, embed_dim), jnp.float32) * 0.01,
    }


def reference(X, T, params):
    """Pure-JAX f32 reference mirroring the PyTorch forward."""
    B = X.shape[0]
    t = T.astype(jnp.float32)[:, None]
    x_proj = t * params["W"] * (2.0 * np.pi)
    fourier = jnp.concatenate([jnp.sin(x_proj), jnp.cos(x_proj)], axis=-1)
    treat = fourier @ params["lin_w"] + params["lin_b"]
    treat = treat * jax.nn.sigmoid(treat)
    img = X.reshape(B, -1) @ params["img_w"] + params["img_b"]
    cat = jnp.concatenate([treat, img], axis=-1)
    return cat @ params["out_w"] + params["out_b"]


if __name__ == "__main__":
    embed_dim = 32
    in_channels = 4
    conditional_len = 16
    batch = 2

    key = jax.random.PRNGKey(0)
    k_x, k_t, k_p = jax.random.split(key, 3)

    X = jax.random.normal(k_x, (batch, in_channels, conditional_len,
                                conditional_len), jnp.float32)
    T = jax.random.uniform(k_t, (batch,), jnp.float32)

    params = init_params(k_p, embed_dim, in_channels, conditional_len)
    prepped = prepare_params(params)          # one-time folding (bf16 weights)

    out = conditional_embedder(X, T, prepped)
    out = jax.block_until_ready(out)

    ref = jax.block_until_ready(reference(X, T, params))
    # bf16 weight/activation quantization at the MXU inputs -> loosened tol.
    np.testing.assert_allclose(np.asarray(out), np.asarray(ref),
                               rtol=2e-2, atol=2e-2)

    assert out.shape == (batch, embed_dim)
    print("KERNEL_OK")
</pallas_src>

<mosaic_0001>
module attributes {stable_mosaic.version = 11 : i64} {
  func.func @_cond_embed_kernel(%arg0: i32, %arg1: memref<8x1xf32, #tpu.memory_space<vmem>>, %arg2: memref<1x16xf32, #tpu.memory_space<vmem>>, %arg3: memref<16x32xbf16, #tpu.memory_space<vmem>>, %arg4: memref<16x32xbf16, #tpu.memory_space<vmem>>, %arg5: memref<1x32xf32, #tpu.memory_space<vmem>>, %arg6: memref<32x32xbf16, #tpu.memory_space<vmem>>, %arg7: memref<8x1024xbf16, #tpu.memory_space<vmem>>, %arg8: memref<1024x32xbf16, #tpu.memory_space<vmem>>, %arg9: memref<1x32xf32, #tpu.memory_space<vmem>>, %arg10: memref<8x32xf32, #tpu.memory_space<vmem>>) attributes {dimension_semantics = [#tpu.dimension_semantics<parallel>], iteration_bounds = array<i64: 1>, scalar_prefetch = 0 : i64, scratch_operands = 0 : i64, tpu.core_type = #tpu.core_type<tc>, window_params = [{transform_indices = @transform_0, window_bounds = array<i64: 8, 1>}, {pipeline_mode = #tpu.pipeline_mode<synchronous>, transform_indices = @transform_1, window_bounds = array<i64: 1, 16>}, {pipeline_mode = #tpu.pipeline_mode<synchronous>, transform_indices = @transform_2, window_bounds = array<i64: 16, 32>}, {pipeline_mode = #tpu.pipeline_mode<synchronous>, transform_indices = @transform_3, window_bounds = array<i64: 16, 32>}, {pipeline_mode = #tpu.pipeline_mode<synchronous>, transform_indices = @transform_4, window_bounds = array<i64: 1, 32>}, {pipeline_mode = #tpu.pipeline_mode<synchronous>, transform_indices = @transform_5, window_bounds = array<i64: 32, 32>}, {transform_indices = @transform_6, window_bounds = array<i64: 8, 1024>}, {pipeline_mode = #tpu.pipeline_mode<synchronous>, transform_indices = @transform_7, window_bounds = array<i64: 1024, 32>}, {pipeline_mode = #tpu.pipeline_mode<synchronous>, transform_indices = @transform_8, window_bounds = array<i64: 1, 32>}, {transform_indices = @transform_9, window_bounds = array<i64: 8, 32>}]} {
    %c0 = arith.constant 0 : index
    %c0_0 = arith.constant 0 : index
    %0 = vector.load %arg1[%c0, %c0_0] : memref<8x1xf32, #tpu.memory_space<vmem>>, vector<8x1xf32>
    %c0_1 = arith.constant 0 : index
    %c0_2 = arith.constant 0 : index
    %1 = vector.load %arg2[%c0_1, %c0_2] : memref<1x16xf32, #tpu.memory_space<vmem>>, vector<1x16xf32>
    %2 = vector.broadcast %0 : vector<8x1xf32> to vector<8x16xf32>
    %3 = vector.broadcast %1 : vector<1x16xf32> to vector<8x16xf32>
    %4 = arith.mulf %2, %3 : vector<8x16xf32>
    %5 = math.sin %4 : vector<8x16xf32>
    %6 = math.cos %4 : vector<8x16xf32>
    %7 = arith.truncf %5 : vector<8x16xf32> to vector<8x16xbf16>
    %c0_3 = arith.constant 0 : index
    %c0_4 = arith.constant 0 : index
    %8 = vector.load %arg3[%c0_3, %c0_4] : memref<16x32xbf16, #tpu.memory_space<vmem>>, vector<16x32xbf16>
    %cst = arith.constant dense<0.000000e+00> : vector<8x32xf32>
    %9 = tpu.matmul %7, %8, %cst {dimension_numbers = #tpu.dot_dimension_numbers<[1], [0], [0], [1], [0, 0, 1, 1], [], []>} : vector<8x16xbf16>, vector<16x32xbf16>, vector<8x32xf32> -> vector<8x32xf32>
    %10 = arith.truncf %6 : vector<8x16xf32> to vector<8x16xbf16>
    %c0_5 = arith.constant 0 : index
    %c0_6 = arith.constant 0 : index
    %11 = vector.load %arg4[%c0_5, %c0_6] : memref<16x32xbf16, #tpu.memory_space<vmem>>, vector<16x32xbf16>
    %cst_7 = arith.constant dense<0.000000e+00> : vector<8x32xf32>
    %12 = tpu.matmul %10, %11, %cst_7 {dimension_numbers = #tpu.dot_dimension_numbers<[1], [0], [0], [1], [0, 0, 1, 1], [], []>} : vector<8x16xbf16>, vector<16x32xbf16>, vector<8x32xf32> -> vector<8x32xf32>
    %13 = arith.addf %9, %12 : vector<8x32xf32>
    %c0_8 = arith.constant 0 : index
    %c0_9 = arith.constant 0 : index
    %14 = vector.load %arg5[%c0_8, %c0_9] : memref<1x32xf32, #tpu.memory_space<vmem>>, vector<1x32xf32>
    %15 = vector.broadcast %14 : vector<1x32xf32> to vector<8x32xf32>
    %16 = arith.addf %13, %15 : vector<8x32xf32>
    %17 = arith.negf %16 : vector<8x32xf32>
    %18 = math.exp %17 : vector<8x32xf32>
    %cst_10 = arith.constant 1.000000e+00 : f32
    %19 = vector.broadcast %cst_10 : f32 to vector<8x32xf32>
    %20 = arith.addf %19, %18 : vector<8x32xf32>
    %21 = arith.divf %19, %20 : vector<8x32xf32>
    %22 = arith.mulf %16, %21 : vector<8x32xf32>
    %23 = arith.truncf %22 : vector<8x32xf32> to vector<8x32xbf16>
    %c0_11 = arith.constant 0 : index
    %c0_12 = arith.constant 0 : index
    %24 = vector.load %arg6[%c0_11, %c0_12] : memref<32x32xbf16, #tpu.memory_space<vmem>>, vector<32x32xbf16>
    %cst_13 = arith.constant dense<0.000000e+00> : vector<8x32xf32>
    %25 = tpu.matmul %23, %24, %cst_13 {dimension_numbers = #tpu.dot_dimension_numbers<[1], [0], [0], [1], [0, 0, 1, 1], [], []>} : vector<8x32xbf16>, vector<32x32xbf16>, vector<8x32xf32> -> vector<8x32xf32>
    %c0_14 = arith.constant 0 : index
    %c0_15 = arith.constant 0 : index
    %26 = vector.load %arg7[%c0_14, %c0_15] : memref<8x1024xbf16, #tpu.memory_space<vmem>>, vector<8x1024xbf16>
    %c0_16 = arith.constant 0 : index
    %c0_17 = arith.constant 0 : index
    %27 = vector.load %arg8[%c0_16, %c0_17] : memref<1024x32xbf16, #tpu.memory_space<vmem>>, vector<1024x32xbf16>
    %cst_18 = arith.constant dense<0.000000e+00> : vector<8x32xf32>
    %28 = tpu.matmul %26, %27, %cst_18 {dimension_numbers = #tpu.dot_dimension_numbers<[1], [0], [0], [1], [0, 0, 1, 1], [], []>} : vector<8x1024xbf16>, vector<1024x32xbf16>, vector<8x32xf32> -> vector<8x32xf32>
    %29 = arith.addf %25, %28 : vector<8x32xf32>
    %c0_19 = arith.constant 0 : index
    %c0_20 = arith.constant 0 : index
    %30 = vector.load %arg9[%c0_19, %c0_20] : memref<1x32xf32, #tpu.memory_space<vmem>>, vector<1x32xf32>
    %31 = vector.broadcast %30 : vector<1x32xf32> to vector<8x32xf32>
    %32 = arith.addf %29, %31 : vector<8x32xf32>
    %c0_21 = arith.constant 0 : index
    %c0_22 = arith.constant 0 : index
    %33 = vector.load %arg10[%c0_21, %c0_22] : memref<8x32xf32, #tpu.memory_space<vmem>>, vector<8x32xf32>
    tpu.vector_store %arg10[%c0_21, %c0_22], %32 {strides = array<i32>} : memref<8x32xf32, #tpu.memory_space<vmem>>, vector<8x32xf32>,
    return
  }
  func.func @transform_0(%arg0: i32) -> (i32, i32) {
    %c0_i32 = arith.constant 0 : i32
    %c0_i32_0 = arith.constant 0 : i32
    return %arg0, %c0_i32 : i32, i32
  }
  func.func @transform_1(%arg0: i32) -> (i32, i32) {
    %c0_i32 = arith.constant 0 : i32
    %c0_i32_0 = arith.constant 0 : i32
    %c0_i32_1 = arith.constant 0 : i32
    return %c0_i32, %c0_i32_0 : i32, i32
  }
  func.func @transform_2(%arg0: i32) -> (i32, i32) {
    %c0_i32 = arith.constant 0 : i32
    %c0_i32_0 = arith.constant 0 : i32
    %c0_i32_1 = arith.constant 0 : i32
    return %c0_i32, %c0_i32_0 : i32, i32
  }
  func.func @transform_3(%arg0: i32) -> (i32, i32) {
    %c0_i32 = arith.constant 0 : i32
    %c0_i32_0 = arith.constant 0 : i32
    %c0_i32_1 = arith.constant 0 : i32
    return %c0_i32, %c0_i32_0 : i32, i32
  }
  func.func @transform_4(%arg0: i32) -> (i32, i32) {
    %c0_i32 = arith.constant 0 : i32
    %c0_i32_0 = arith.constant 0 : i32
    %c0_i32_1 = arith.constant 0 : i32
    return %c0_i32, %c0_i32_0 : i32, i32
  }
  func.func @transform_5(%arg0: i32) -> (i32, i32) {
    %c0_i32 = arith.constant 0 : i32
    %c0_i32_0 = arith.constant 0 : i32
    %c0_i32_1 = arith.constant 0 : i32
    return %c0_i32, %c0_i32_0 : i32, i32
  }
  func.func @transform_6(%arg0: i32) -> (i32, i32) {
    %c0_i32 = arith.constant 0 : i32
    %c0_i32_0 = arith.constant 0 : i32
    return %arg0, %c0_i32 : i32, i32
  }
  func.func @transform_7(%arg0: i32) -> (i32, i32) {
    %c0_i32 = arith.constant 0 : i32
    %c0_i32_0 = arith.constant 0 : i32
    %c0_i32_1 = arith.constant 0 : i32
    return %c0_i32, %c0_i32_0 : i32, i32
  }
  func.func @transform_8(%arg0: i32) -> (i32, i32) {
    %c0_i32 = arith.constant 0 : i32
    %c0_i32_0 = arith.constant 0 : i32
    %c0_i32_1 = arith.constant 0 : i32
    return %c0_i32, %c0_i32_0 : i32, i32
  }
  func.func @transform_9(%arg0: i32) -> (i32, i32) {
    %c0_i32 = arith.constant 0 : i32
    %c0_i32_0 = arith.constant 0 : i32
    return %arg0, %c0_i32 : i32, i32
  }
}

</mosaic_0001>

<llo_original>
// kernel: tpu_custom_call.1
$region0: #{tpu_custom_call.1}
  #allocation0 [shape = 'u32[]', space=smem, size = 0x4, offset = 0x4, fixed_abs, tag = 'smem constant byte address 0x4 - core index']
  #allocation1 [shape = 'u32[144,128]{1,0:T(1,128)}', space=vmem, size = 0x12000, scoped, tag = 'internal scratch']
  %s0 = inlined_call_operand.vmem [shape: f32[8,1], index: 0, kind: input, shape index: {}]
  %s1 = inlined_call_operand.vmem [shape: f32[1,16], index: 1, kind: input, shape index: {}]
  %s2 = inlined_call_operand.vmem [shape: bf16[16,32], index: 2, kind: input, shape index: {}]
  %s3 = inlined_call_operand.vmem [shape: bf16[16,32], index: 3, kind: input, shape index: {}]
  %s4 = inlined_call_operand.vmem [shape: f32[1,32], index: 4, kind: input, shape index: {}]
  %s5 = inlined_call_operand.vmem [shape: bf16[32,32], index: 5, kind: input, shape index: {}]
  %s6 = inlined_call_operand.vmem [shape: bf16[8,1024], index: 6, kind: input, shape index: {}]
  %s7 = inlined_call_operand.vmem [shape: bf16[1024,32], index: 7, kind: input, shape index: {}]
  %s8 = inlined_call_operand.vmem [shape: f32[1,32], index: 8, kind: input, shape index: {}]
  %s9 = inlined_call_operand.hbm [shape: f32[8,32], index: 9, kind: output, shape index: {}]
  %s10 = sld [smem:[#allocation0]]
  $region46: #{tpu_custom_call.1} parent=0
    _
  %s12 = ssub.s32 1, %s10
  %s13 = scalar_select 0, %s12, %s10
  $region1: #{tpu_custom_call.1} parent=0
    #allocation2 [shape = 'u8[4096]{0}', space=vmem, size = 0x1000, scoped, tag = 'output window, operand 0, single buffered']
    #allocation3 [shape = 's32[1]{0}', space=sflag, size = 0x4, scoped, tag = 'scoped memory for tpu_custom_call.1']
    %14 = vsyncpa [#allocation3], 0
    // Predicated region
    $region2: #{tpu_custom_call.1} parent=1 // pred_check
      _
    $region3: #{tpu_custom_call.1} parent=1 // pred_check_branch
      %16 = sbr.rel (0) target = $region5
    $region4: #{tpu_custom_call.1} parent=1 // pred_region
      _
    $region5: #{tpu_custom_call.1} parent=1 // pred_fallthru
      _
    // Predicated region
    $region6: #{tpu_custom_call.1} parent=1 // pred_check
      _
    $region7: #{tpu_custom_call.1} parent=1 // pred_check_branch
      %18 = sbr.rel (0) target = $region9
    $region8: #{tpu_custom_call.1} parent=1 // pred_region
      _
    $region9: #{tpu_custom_call.1} parent=1 // pred_fallthru
      _
    // Predicated region
    $region10: #{tpu_custom_call.1} parent=1 // pred_check
      _
    $region11: #{tpu_custom_call.1} parent=1 // pred_check_branch
      %20 = sbr.rel (0) target = $region13
    $region12: #{tpu_custom_call.1} parent=1 // pred_region
      _
    $region13: #{tpu_custom_call.1} parent=1 // pred_fallthru
      _
    // Predicated region
    $region14: #{tpu_custom_call.1} parent=1 // pred_check
      _
    $region15: #{tpu_custom_call.1} parent=1 // pred_check_branch
      %22 = sbr.rel (0) target = $region17
    $region16: #{tpu_custom_call.1} parent=1 // pred_region
      _
    $region17: #{tpu_custom_call.1} parent=1 // pred_fallthru
      _
    // Predicated region
    $region18: #{tpu_custom_call.1} parent=1 // pred_check
      _
    $region19: #{tpu_custom_call.1} parent=1 // pred_check_branch
      %24 = sbr.rel (0) target = $region21
    $region20: #{tpu_custom_call.1} parent=1 // pred_region
      _
    $region21: #{tpu_custom_call.1} parent=1 // pred_fallthru
      _
    // Predicated region
    $region22: #{tpu_custom_call.1} parent=1 // pred_check
      _
    $region23: #{tpu_custom_call.1} parent=1 // pred_check_branch
      %26 = sbr.rel (0) target = $region25
    $region24: #{tpu_custom_call.1} parent=1 // pred_region
      _
    $region25: #{tpu_custom_call.1} parent=1 // pred_fallthru
      _
    // Predicated region
    $region26: #{tpu_custom_call.1} parent=1 // pred_check
      _
    $region27: #{tpu_custom_call.1} parent=1 // pred_check_branch
      %28 = sbr.rel (0) target = $region29
    $region28: #{tpu_custom_call.1} parent=1 // pred_region
      _
    $region29: #{tpu_custom_call.1} parent=1 // pred_fallthru
      _
    // Predicated region
    $region30: #{tpu_custom_call.1} parent=1 // pred_check
      _
    $region31: #{tpu_custom_call.1} parent=1 // pred_check_branch
      %30 = sbr.rel (0) target = $region33
    $region32: #{tpu_custom_call.1} parent=1 // pred_region
      _
    $region33: #{tpu_custom_call.1} parent=1 // pred_fallthru
      _
    // Predicated region
    $region34: #{tpu_custom_call.1} parent=1 // pred_check
      _
    $region35: #{tpu_custom_call.1} parent=1 // pred_check_branch
      %32 = sbr.rel (0) target = $region37
    $region36: #{tpu_custom_call.1} parent=1 // pred_region
      _
    $region37: #{tpu_custom_call.1} parent=1 // pred_fallthru
      _
    %v34 = vld [vmem:[%s0] sm:$0xff]
    %v35 = vld [vmem:[%s1] sm:$0x1]
    %37 = vset.pattern.permute.xlu0 0
    %38 = vperm.xlu0 %37, %v34
    %v39 = vpop.permute.xlu0 %38
    %v42 = vlaneseq
    %v43 = vshrl.u32 %v42, 7
    %v44 = vsub.s32 0, %v43
    %v45 = vrot.slane %v35, %v44
    %v47 = vmul.f32 %v39, %v45
    %v48 = vand.u32 2147483647, %v47
    %vm49 = vcmp.le.f32.partialorder %v48, 0.7853982
    %vm50 = vcmp.lt.s32.totalorder %v47, 0
    %v51 = vand.u32 %v47, 2139095040
    %v52 = vshrl.u32 %v51, 23
    %v53 = vsub.s32 %v52, 127
    %v54 = vand.u32 2147483647, %v47
    %v55 = vand.u32 %v54, 8388607
    %v56 = vor.u32 %v55, 8388608
    %v57 = vsub.s32 0, %v56
    %v58 = vadd.s32 %v53, 1
    %vm59 = vcmp.gt.s32.totalorder %v58, 0
    %v60 = vsel %vm59, %v58, 0
    %v61 = vshrl.u32 %v60, 5
    %v62 = vand.u32 %v60, 31
    %v63 = vsub.s32 32, %v62
    %v64 = vshrl.u32 683565275, %v63
    %v65 = vshll.u32 683565275, %v62
    %v66 = vshrl.u32 2475754826, %v63
    %v67 = vor.u32 %v65, %v66
    %v68 = vshll.u32 2475754826, %v62
    %v69 = vshrl.u32 2131351028, %v63
    %v70 = vor.u32 %v68, %v69
    %v71 = vshll.u32 2131351028, %v62
    %v72 = vshrl.u32 2102212464, %v63
    %v73 = vor.u32 %v71, %v72
    %v74 = vshll.u32 2102212464, %v62
    %v75 = vshrl.u32 920167782, %v63
    %v76 = vor.u32 %v74, %v75
    %v77 = vshll.u32 920167782, %v62
    %v78 = vshrl.u32 1326507024, %v63
    %v79 = vor.u32 %v77, %v78
    %vm80 = vcmp.lt.s32.totalorder %v61, 1
    %vm81 = vcmp.lt.s32.totalorder %v61, 2
    %vm82 = vcmp.lt.s32.totalorder %v61, 3
    %vm83 = vcmp.lt.s32.totalorder %v61, 4
    %v84 = vsel %vm80, %v64, %v67
    %v85 = vsel %vm83, %v73, 2102212464
    %v86 = vsel %vm82, %v70, %v85
    %v87 = vsel %vm81, %v84, %v86
    %v88 = vsel %vm80, %v67, %v70
    %v89 = vsel %vm83, %v76, 920167782
    %v90 = vsel %vm82, %v73, %v89
    %v91 = vsel %vm81, %v88, %v90
    %v92 = vsel %vm80, %v70, %v73
    %v93 = vsel %vm83, %v79, 1326507024
    %v94 = vsel %vm82, %v76, %v93
    %v95 = vsel %vm81, %v92, %v94
    %v96 = vshll.u32 %v56, 8
    %v97 = vmul.u32.u64.compose %v96, %v95
    %v98 = vextract.low.u32 %v97
    %v99 = vextract.high.u32 %v97
    %v100 = vmul.u32.u64.compose %v96, %v91
    %v101 = vextract.low.u32 %v100
    %v102 = vextract.high.u32 %v100
    %v103 = vmul.u32 %v96, %v87
    %v104 = vadd.s32 %v99, %v101
    %vm105 = vc.u32 %v99, %v101
    %v106 = vadd.s32 %v102, 1
    %v107 = vsel %vm105, %v106, %v102
    %v108 = vadd.s32 %v103, %v107
    %v109 = vadd.s32 %v108, 536870912
    %v110 = vshrl.u32 %v109, 30
    %v111 = vshll.u32 %v110, 30
    %v112 = vsub.s32 %v108, %v111
    %vm113 = vcmp.lt.s32.totalorder %v112, 0
    %v114 = vsub.s32 0, %v112
    %v115 = vsel %vm113, %v114, %v112
    %v116 = vclz %v115
    %v117 = vsub.s32 %v116, 2
    %vm118 = vcmp.gt.s32.totalorder 0, %v117
    %v119 = vsel %vm118, 0, %v117
    %v120 = vsub.s32 32, %v119
    %v121 = vshll.u32 %v112, %v119
    %v122 = vshrl.u32 %v104, %v120
    %v123 = vor.u32 %v121, %v122
    %v124 = vsub.s32 4294967266, %v119
    %v125 = vadd.s32 %v124, 127
    %v126 = vshll.u32 %v125, 23
    %v127 = vor.u32 4788187, %v126
    %v128 = vand.u32 2147483647, %v127
    %v130 = vcvt.s32.f32 %v123
    %v131 = vmul.f32 %v130, %v128
    %v132 = vxor.u32 %v131, 2147483648
    %v133 = vsel %vm50, %v132, %v131
    %v134 = vsub.s32 4, %v110
    %v135 = vsel %vm50, %v134, %v110
    %v136 = vsel %vm49, %v47, %v133
    %v137 = vsel %vm49, 0, %v135
    %v138 = vcosq.f32.pop %v136
    %v139 = vsinq.f32.pop %v136
    %vm140 = vweird.f32 %v47
    %v141 = vadd.s32 %v137, 3
    %v142 = vand.u32 %v141, 3
    %vm143 = vcmp.lt.s32.totalorder %v142, 2
    %vm144 = vcmp.eq.s32.totalorder %v142, 0
    %v145 = vxor.u32 %v139, 2147483648
    %v146 = vsel %vm144, %v138, %v145
    %vm147 = vcmp.eq.s32.totalorder %v142, 2
    %v148 = vxor.u32 %v138, 2147483648
    %v149 = vsel %vm147, %v148, %v139
    %v150 = vsel %vm143, %v146, %v149
    %v151 = vsel %vm140, nan, %v150
    %v152 = vand.u32 2147483647, %v47
    %vm153 = vcmp.le.f32.partialorder %v152, 0.7853982
    %vm154 = vcmp.lt.s32.totalorder %v47, 0
    %v155 = vand.u32 %v47, 2139095040
    %v156 = vshrl.u32 %v155, 23
    %v157 = vsub.s32 %v156, 127
    %v158 = vand.u32 2147483647, %v47
    %v159 = vand.u32 %v158, 8388607
    %v160 = vor.u32 %v159, 8388608
    %v161 = vsub.s32 0, %v160
    %v162 = vadd.s32 %v157, 1
    %vm163 = vcmp.gt.s32.totalorder %v162, 0
    %v164 = vsel %vm163, %v162, 0
    %v165 = vshrl.u32 %v164, 5
    %v166 = vand.u32 %v164, 31
    %v167 = vsub.s32 32, %v166
    %v168 = vshrl.u32 683565275, %v167
    %v169 = vshll.u32 683565275, %v166
    %v170 = vshrl.u32 2475754826, %v167
    %v171 = vor.u32 %v169, %v170
    %v172 = vshll.u32 2475754826, %v166
    %v173 = vshrl.u32 2131351028, %v167
    %v174 = vor.u32 %v172, %v173
    %v175 = vshll.u32 2131351028, %v166
    %v176 = vshrl.u32 2102212464, %v167
    %v177 = vor.u32 %v175, %v176
    %v178 = vshll.u32 2102212464, %v166
    %v179 = vshrl.u32 920167782, %v167
    %v180 = vor.u32 %v178, %v179
    %v181 = vshll.u32 920167782, %v166
    %v182 = vshrl.u32 1326507024, %v167
    %v183 = vor.u32 %v181, %v182
    %vm184 = vcmp.lt.s32.totalorder %v165, 1
    %vm185 = vcmp.lt.s32.totalorder %v165, 2
    %vm186 = vcmp.lt.s32.totalorder %v165, 3
    %vm187 = vcmp.lt.s32.totalorder %v165, 4
    %v188 = vsel %vm184, %v168, %v171
    %v189 = vsel %vm187, %v177, 2102212464
    %v190 = vsel %vm186, %v174, %v189
    %v191 = vsel %vm185, %v188, %v190
    %v192 = vsel %vm184, %v171, %v174
    %v193 = vsel %vm187, %v180, 920167782
    %v194 = vsel %vm186, %v177, %v193
    %v195 = vsel %vm185, %v192, %v194
    %v196 = vsel %vm184, %v174, %v177
    %v197 = vsel %vm187, %v183, 1326507024
    %v198 = vsel %vm186, %v180, %v197
    %v199 = vsel %vm185, %v196, %v198
    %v200 = vshll.u32 %v160, 8
    %v201 = vmul.u32.u64.compose %v200, %v199
    %v202 = vextract.low.u32 %v201
    %v203 = vextract.high.u32 %v201
    %v204 = vmul.u32.u64.compose %v200, %v195
    %v205 = vextract.low.u32 %v204
    %v206 = vextract.high.u32 %v204
    %v207 = vmul.u32 %v200, %v191
    %v208 = vadd.s32 %v203, %v205
    %vm209 = vc.u32 %v203, %v205
    %v210 = vadd.s32 %v206, 1
    %v211 = vsel %vm209, %v210, %v206
    %v212 = vadd.s32 %v207, %v211
    %v213 = vadd.s32 %v212, 536870912
    %v214 = vshrl.u32 %v213, 30
    %v215 = vshll.u32 %v214, 30
    %v216 = vsub.s32 %v212, %v215
    %vm217 = vcmp.lt.s32.totalorder %v216, 0
    %v218 = vsub.s32 0, %v216
    %v219 = vsel %vm217, %v218, %v216
    %v220 = vclz %v219
    %v221 = vsub.s32 %v220, 2
    %vm222 = vcmp.gt.s32.totalorder 0, %v221
    %v223 = vsel %vm222, 0, %v221
    %v224 = vsub.s32 32, %v223
    %v225 = vshll.u32 %v216, %v223
    %v226 = vshrl.u32 %v208, %v224
    %v227 = vor.u32 %v225, %v226
    %v228 = vsub.s32 4294967266, %v223
    %v229 = vadd.s32 %v228, 127
    %v230 = vshll.u32 %v229, 23
    %v231 = vor.u32 4788187, %v230
    %v232 = vand.u32 2147483647, %v231
    %v234 = vcvt.s32.f32 %v227
    %v235 = vmul.f32 %v234, %v232
    %v236 = vxor.u32 %v235, 2147483648
    %v237 = vsel %vm154, %v236, %v235
    %v238 = vsub.s32 4, %v214
    %v239 = vsel %vm154, %v238, %v214
    %v240 = vsel %vm153, %v47, %v237
    %v241 = vsel %vm153, 0, %v239
    %v242 = vcosq.f32.pop %v240
    %v243 = vsinq.f32.pop %v240
    %vm244 = vweird.f32 %v47
    %v245 = vand.u32 %v241, 3
    %vm246 = vcmp.lt.s32.totalorder %v245, 2
    %vm247 = vcmp.eq.s32.totalorder %v245, 0
    %v248 = vxor.u32 %v243, 2147483648
    %v249 = vsel %vm247, %v242, %v248
    %vm250 = vcmp.eq.s32.totalorder %v245, 2
    %v251 = vxor.u32 %v242, 2147483648
    %v252 = vsel %vm250, %v251, %v243
    %v253 = vsel %vm246, %v249, %v252
    %v254 = vsel %vm244, nan, %v253
    %v255 = vpack.c.bf16 %v151, %v151
    %v256 = vld [vmem:[%s2] sm:$0xf]
    %v257 = vld [vmem:[%s2 + $0x4] sm:$0xf]
    %v258 = vpack.c.bf16 %v254, %v254
    %v259 = vld [vmem:[%s3] sm:$0xf]
    %v260 = vld [vmem:[%s3 + $0x4] sm:$0xf]
    %v263 = vunpack.c.l.b16 %v259
    %v264 = vunpack.c.l.b16 %v260
    %v265 = vpack.c.b16 %v264, %v263
    %vm267 = vcmask 130048
    %v269 = vsel %vm267, %v258, 0
    %271 = vmatprep.subr.bf16.mxu0 0
    %272 = vmatpush1.bf16.msra.mxu0 0
    %273 = vmatprep.subr.bf16.mxu0 0
    %274 = vmatpush1.bf16.msra.mxu0 0
    %275 = vmatprep.subr.bf16.mxu0 0
    %276 = vmatpush1.bf16.msra.mxu0 0
    %277 = vmatprep.subr.bf16.mxu0 0
    %278 = vmatpush1.bf16.msra.mxu0 0
    %279 = vmatprep.subr.bf16.mxu0 0
    %280 = vmatpush1.bf16.msra.mxu0 0
    %281 = vmatprep.subr.bf16.mxu0 0
    %282 = vmatpush1.bf16.msra.mxu0 0
    %283 = vmatprep.subr.bf16.mxu0 0
    %284 = vmatpush1.bf16.msra.mxu0 0
    %285 = vmatprep.subr.bf16.mxu0 0
    %286 = vmatpush1.bf16.msra.mxu0 %v265
    %287 = vmatprep.subr.bf16.mxu0 0
    %288 = vmatpush2.bf16.msra.mxu0 0
    %289 = vmatprep.subr.bf16.mxu0 0
    %290 = vmatpush2.bf16.msra.mxu0 0
    %291 = vmatprep.subr.bf16.mxu0 0
    %292 = vmatpush2.bf16.msra.mxu0 0
    %293 = vmatprep.subr.bf16.mxu0 0
    %294 = vmatpush2.bf16.msra.mxu0 0
    %295 = vmatprep.subr.bf16.mxu0 0
    %296 = vmatpush2.bf16.msra.mxu0 0
    %297 = vmatprep.subr.bf16.mxu0 0
    %298 = vmatpush2.bf16.msra.mxu0 0
    %299 = vmatprep.subr.bf16.mxu0 0
    %300 = vmatpush2.bf16.msra.mxu0 0
    %301 = vmatprep.subr.bf16.mxu0 0
    %302 = vmatpush2.bf16.msra.mxu0 0
    %303 = vmatprep.mubr.bf16.mxu0 0
    %304 = vmatmul.mubr.bf16.gmra.mxu0 %v269
    %v305 = vpop.f32.mrf.mxu0
    %v306 = vadd.f32 0.0, %v305
    %v307 = vpop.f32.mrf.mxu0
    %v308 = vpop.f32.mrf.mxu0
    %v309 = vpop.f32.mrf.mxu0
    %310 = vdwg.mxu0
    %v313 = vunpack.c.l.b16 %v256
    %v314 = vunpack.c.l.b16 %v257
    %v315 = vpack.c.b16 %v314, %v313
    %v318 = vsel %vm267, %v255, 0
    %320 = vmatprep.subr.bf16.mxu0 0
    %321 = vmatpush1.bf16.msra.mxu0 0
    %322 = vmatprep.subr.bf16.mxu0 0
    %323 = vmatpush1.bf16.msra.mxu0 0
    %324 = vmatprep.subr.bf16.mxu0 0
    %325 = vmatpush1.bf16.msra.mxu0 0
    %326 = vmatprep.subr.bf16.mxu0 0
    %327 = vmatpush1.bf16.msra.mxu0 0
    %328 = vmatprep.subr.bf16.mxu0 0
    %329 = vmatpush1.bf16.msra.mxu0 0
    %330 = vmatprep.subr.bf16.mxu0 0
    %331 = vmatpush1.bf16.msra.mxu0 0
    %332 = vmatprep.subr.bf16.mxu0 0
    %333 = vmatpush1.bf16.msra.mxu0 0
    %334 = vmatprep.subr.bf16.mxu0 0
    %335 = vmatpush1.bf16.msra.mxu0 %v315
    %336 = vmatprep.subr.bf16.mxu0 0
    %337 = vmatpush2.bf16.msra.mxu0 0
    %338 = vmatprep.subr.bf16.mxu0 0
    %339 = vmatpush2.bf16.msra.mxu0 0
    %340 = vmatprep.subr.bf16.mxu0 0
    %341 = vmatpush2.bf16.msra.mxu0 0
    %342 = vmatprep.subr.bf16.mxu0 0
    %343 = vmatpush2.bf16.msra.mxu0 0
    %344 = vmatprep.subr.bf16.mxu0 0
    %345 = vmatpush2.bf16.msra.mxu0 0
    %346 = vmatprep.subr.bf16.mxu0 0
    %347 = vmatpush2.bf16.msra.mxu0 0
    %348 = vmatprep.subr.bf16.mxu0 0
    %349 = vmatpush2.bf16.msra.mxu0 0
    %350 = vmatprep.subr.bf16.mxu0 0
    %351 = vmatpush2.bf16.msra.mxu0 0
    %352 = vmatprep.mubr.bf16.mxu0 0
    %353 = vmatmul.mubr.bf16.gmra.mxu0 %v318
    %v354 = vpop.f32.mrf.mxu0
    %v355 = vadd.f32 %v306, %v354
    %v356 = vpop.f32.mrf.mxu0
    %v357 = vpop.f32.mrf.mxu0
    %v358 = vpop.f32.mrf.mxu0
    %359 = vdwg.mxu0
    %v360 = vld [vmem:[%s4] sm:$0x1]
    %v362 = vlaneseq
    %v363 = vshrl.u32 %v362, 7
    %v364 = vsub.s32 0, %v363
    %v365 = vrot.slane %v360, %v364
    %v367 = vadd.f32 %v355, %v365
    %v368 = vxor.u32 %v367, 2147483648
    %v369 = vmul.f32 %v368, 1.442695
    %v370 = vpow.pop %v369
    %v371 = vadd.f32 %v370, 1.0
    %v372 = vrcp.pop %v371
    %v373 = vmul.f32 1.0, %v372
    %v374 = vmul.f32 %v367, %v373
    %v375 = vpack.c.bf16 %v374, %v374
    %v376 = vld [vmem:[%s5] sm:$0xf]
    %v377 = vld [vmem:[%s5 + $0x4] sm:$0xf]
    %v378 = vld [vmem:[%s5 + $0x8] sm:$0xf]
    %v379 = vld [vmem:[%s5 + $0xc] sm:$0xf]
    %v380 = vld [vmem:[%s6] sm:$0xff]
    %v381 = vld [vmem:[%s6 + $0x8] sm:$0xff]
    %v382 = vld [vmem:[%s6 + $0x10] sm:$0xff]
    %v383 = vld [vmem:[%s6 + $0x18] sm:$0xff]
    %v384 = vld [vmem:[%s7] sm:$0xf]
    %v385 = vld [vmem:[%s7 + $0x4] sm:$0xf]
    %v386 = vld [vmem:[%s7 + $0x8] sm:$0xf]
    %v387 = vld [vmem:[%s7 + $0xc] sm:$0xf]
    %v388 = vld [vmem:[%s7 + $0x10] sm:$0xf]
    %v389 = vld [vmem:[%s7 + $0x14] sm:$0xf]
    %v390 = vld [vmem:[%s7 + $0x18] sm:$0xf]
    %v391 = vld [vmem:[%s7 + $0x1c] sm:$0xf]
    %v392 = vld [vmem:[%s7 + $0x20] sm:$0xf]
    %v393 = vld [vmem:[%s7 + $0x24] sm:$0xf]
    %v394 = vld [vmem:[%s7 + $0x28] sm:$0xf]
    %v395 = vld [vmem:[%s7 + $0x2c] sm:$0xf]
    %v396 = vld [vmem:[%s7 + $0x30] sm:$0xf]
    %v397 = vld [vmem:[%s7 + $0x34] sm:$0xf]
    %v398 = vld [vmem:[%s7 + $0x38] sm:$0xf]
    %v399 = vld [vmem:[%s7 + $0x3c] sm:$0xf]
    %v400 = vld [vmem:[%s7 + $0x40] sm:$0xf]
    %v401 = vld [vmem:[%s7 + $0x44] sm:$0xf]
    %v402 = vld [vmem:[%s7 + $0x48] sm:$0xf]
    %v403 = vld [vmem:[%s7 + $0x4c] sm:$0xf]
    %v404 = vld [vmem:[%s7 + $0x50] sm:$0xf]
    %v405 = vld [vmem:[%s7 + $0x54] sm:$0xf]
    %v406 = vld [vmem:[%s7 + $0x58] sm:$0xf]
    %v407 = vld [vmem:[%s7 + $0x5c] sm:$0xf]
    %v408 = vld [vmem:[%s7 + $0x60] sm:$0xf]
    %v409 = vld [vmem:[%s7 + $0x64] sm:$0xf]
    %v410 = vld [vmem:[%s7 + $0x68] sm:$0xf]
    %v411 = vld [vmem:[%s7 + $0x6c] sm:$0xf]
    %v412 = vld [vmem:[%s7 + $0x70] sm:$0xf]
    %v413 = vld [vmem:[%s7 + $0x74] sm:$0xf]
    %v414 = vld [vmem:[%s7 + $0x78] sm:$0xf]
    %v415 = vld [vmem:[%s7 + $0x7c] sm:$0xf]
    %v416 = vld [vmem:[%s7 + $0x80] sm:$0xf]
    %v417 = vld [vmem:[%s7 + $0x84] sm:$0xf]
    %v418 = vld [vmem:[%s7 + $0x88] sm:$0xf]
    %v419 = vld [vmem:[%s7 + $0x8c] sm:$0xf]
    %v420 = vld [vmem:[%s7 + $0x90] sm:$0xf]
    %v421 = vld [vmem:[%s7 + $0x94] sm:$0xf]
    %v422 = vld [vmem:[%s7 + $0x98] sm:$0xf]
    %v423 = vld [vmem:[%s7 + $0x9c] sm:$0xf]
    %v424 = vld [vmem:[%s7 + $0xa0] sm:$0xf]
    %v425 = vld [vmem:[%s7 + $0xa4] sm:$0xf]
    %v426 = vld [vmem:[%s7 + $0xa8] sm:$0xf]
    %v427 = vld [vmem:[%s7 + $0xac] sm:$0xf]
    %v428 = vld [vmem:[%s7 + $0xb0] sm:$0xf]
    %v429 = vld [vmem:[%s7 + $0xb4] sm:$0xf]
    %v430 = vld [vmem:[%s7 + $0xb8] sm:$0xf]
    %v431 = vld [vmem:[%s7 + $0xbc] sm:$0xf]
    %v432 = vld [vmem:[%s7 + $0xc0] sm:$0xf]
    %v433 = vld [vmem:[%s7 + $0xc4] sm:$0xf]
    %v434 = vld [vmem:[%s7 + $0xc8] sm:$0xf]
    %v435 = vld [vmem:[%s7 + $0xcc] sm:$0xf]
    %v436 = vld [vmem:[%s7 + $0xd0] sm:$0xf]
    %v437 = vld [vmem:[%s7 + $0xd4] sm:$0xf]
    %v438 = vld [vmem:[%s7 + $0xd8] sm:$0xf]
    %v439 = vld [vmem:[%s7 + $0xdc] sm:$0xf]
    %v440 = vld [vmem:[%s7 + $0xe0] sm:$0xf]
    %v441 = vld [vmem:[%s7 + $0xe4] sm:$0xf]
    %v442 = vld [vmem:[%s7 + $0xe8] sm:$0xf]
    %v443 = vld [vmem:[%s7 + $0xec] sm:$0xf]
    %v444 = vld [vmem:[%s7 + $0xf0] sm:$0xf]
    %v445 = vld [vmem:[%s7 + $0xf4] sm:$0xf]
    %v446 = vld [vmem:[%s7 + $0xf8] sm:$0xf]
    %v447 = vld [vmem:[%s7 + $0xfc] sm:$0xf]
    %v448 = vld [vmem:[%s7 + $0x100] sm:$0xf]
    %v449 = vld [vmem:[%s7 + $0x104] sm:$0xf]
    %v450 = vld [vmem:[%s7 + $0x108] sm:$0xf]
    %v451 = vld [vmem:[%s7 + $0x10c] sm:$0xf]
    %v452 = vld [vmem:[%s7 + $0x110] sm:$0xf]
    %v453 = vld [vmem:[%s7 + $0x114] sm:$0xf]
    %v454 = vld [vmem:[%s7 + $0x118] sm:$0xf]
    %v455 = vld [vmem:[%s7 + $0x11c] sm:$0xf]
    %v456 = vld [vmem:[%s7 + $0x120] sm:$0xf]
    %v457 = vld [vmem:[%s7 + $0x124] sm:$0xf]
    %v458 = vld [vmem:[%s7 + $0x128] sm:$0xf]
    %v459 = vld [vmem:[%s7 + $0x12c] sm:$0xf]
    %v460 = vld [vmem:[%s7 + $0x130] sm:$0xf]
    %v461 = vld [vmem:[%s7 + $0x134] sm:$0xf]
    %v462 = vld [vmem:[%s7 + $0x138] sm:$0xf]
    %v463 = vld [vmem:[%s7 + $0x13c] sm:$0xf]
    %v464 = vld [vmem:[%s7 + $0x140] sm:$0xf]
    %v465 = vld [vmem:[%s7 + $0x144] sm:$0xf]
    %v466 = vld [vmem:[%s7 + $0x148] sm:$0xf]
    %v467 = vld [vmem:[%s7 + $0x14c] sm:$0xf]
    %v468 = vld [vmem:[%s7 + $0x150] sm:$0xf]
    %v469 = vld [vmem:[%s7 + $0x154] sm:$0xf]
    %v470 = vld [vmem:[%s7 + $0x158] sm:$0xf]
    %v471 = vld [vmem:[%s7 + $0x15c] sm:$0xf]
    %v472 = vld [vmem:[%s7 + $0x160] sm:$0xf]
    %v473 = vld [vmem:[%s7 + $0x164] sm:$0xf]
    %v474 = vld [vmem:[%s7 + $0x168] sm:$0xf]
    %v475 = vld [vmem:[%s7 + $0x16c] sm:$0xf]
    %v476 = vld [vmem:[%s7 + $0x170] sm:$0xf]
    %v477 = vld [vmem:[%s7 + $0x174] sm:$0xf]
    %v478 = vld [vmem:[%s7 + $0x178] sm:$0xf]
    %v479 = vld [vmem:[%s7 + $0x17c] sm:$0xf]
    %v480 = vld [vmem:[%s7 + $0x180] sm:$0xf]
    %v481 = vld [vmem:[%s7 + $0x184] sm:$0xf]
    %v482 = vld [vmem:[%s7 + $0x188] sm:$0xf]
    %v483 = vld [vmem:[%s7 + $0x18c] sm:$0xf]
    %v484 = vld [vmem:[%s7 + $0x190] sm:$0xf]
    %v485 = vld [vmem:[%s7 + $0x194] sm:$0xf]
    %v486 = vld [vmem:[%s7 + $0x198] sm:$0xf]
    %v487 = vld [vmem:[%s7 + $0x19c] sm:$0xf]
    %v488 = vld [vmem:[%s7 + $0x1a0] sm:$0xf]
    %v489 = vld [vmem:[%s7 + $0x1a4] sm:$0xf]
    %v490 = vld [vmem:[%s7 + $0x1a8] sm:$0xf]
    %v491 = vld [vmem:[%s7 + $0x1ac] sm:$0xf]
    %v492 = vld [vmem:[%s7 + $0x1b0] sm:$0xf]
    %v493 = vld [vmem:[%s7 + $0x1b4] sm:$0xf]
    %v494 = vld [vmem:[%s7 + $0x1b8] sm:$0xf]
    %v495 = vld [vmem:[%s7 + $0x1bc] sm:$0xf]
    %v496 = vld [vmem:[%s7 + $0x1c0] sm:$0xf]
    %v497 = vld [vmem:[%s7 + $0x1c4] sm:$0xf]
    %v498 = vld [vmem:[%s7 + $0x1c8] sm:$0xf]
    %v499 = vld [vmem:[%s7 + $0x1cc] sm:$0xf]
    %v500 = vld [vmem:[%s7 + $0x1d0] sm:$0xf]
    %v501 = vld [vmem:[%s7 + $0x1d4] sm:$0xf]
    %v502 = vld [vmem:[%s7 + $0x1d8] sm:$0xf]
    %v503 = vld [vmem:[%s7 + $0x1dc] sm:$0xf]
    %v504 = vld [vmem:[%s7 + $0x1e0] sm:$0xf]
    %v505 = vld [vmem:[%s7 + $0x1e4] sm:$0xf]
    %v506 = vld [vmem:[%s7 + $0x1e8] sm:$0xf]
    %v507 = vld [vmem:[%s7 + $0x1ec] sm:$0xf]
    %v508 = vld [vmem:[%s7 + $0x1f0] sm:$0xf]
    %v509 = vld [vmem:[%s7 + $0x1f4] sm:$0xf]
    %v510 = vld [vmem:[%s7 + $0x1f8] sm:$0xf]
    %v511 = vld [vmem:[%s7 + $0x1fc] sm:$0xf]
    %v516 = vunpack.c.l.b16 %v380
    %v517 = vunpack.c.h.b16 %v380
    %v518 = vunpack.c.l.b16 %v381
    %v519 = vunpack.c.h.b16 %v381
    %v520 = vunpack.c.l.b16 %v382
    %v521 = vunpack.c.h.b16 %v382
    %v522 = vunpack.c.l.b16 %v383
    %v523 = vunpack.c.h.b16 %v383
    %v524 = vpack.c.b16 %v516, %v516
    %v525 = vpack.c.b16 %v517, %v517
    %v526 = vpack.c.b16 %v518, %v518
    %v527 = vpack.c.b16 %v519, %v519
    %v528 = vpack.c.b16 %v520, %v520
    %v529 = vpack.c.b16 %v521, %v521
    %v530 = vpack.c.b16 %v522, %v522
    %v531 = vpack.c.b16 %v523, %v523
    %v668 = vunpack.c.l.b16 %v384
    %v669 = vunpack.c.l.b16 %v385
    %v670 = vunpack.c.l.b16 %v386
    %v671 = vunpack.c.l.b16 %v387
    %v672 = vunpack.c.l.b16 %v388
    %v673 = vunpack.c.l.b16 %v389
    %v674 = vunpack.c.l.b16 %v390
    %v675 = vunpack.c.l.b16 %v391
    %v676 = vunpack.c.l.b16 %v392
    %v677 = vunpack.c.l.b16 %v393
    %v678 = vunpack.c.l.b16 %v394
    %v679 = vunpack.c.l.b16 %v395
    %v680 = vunpack.c.l.b16 %v396
    %v681 = vunpack.c.l.b16 %v397
    %v682 = vunpack.c.l.b16 %v398
    %v683 = vunpack.c.l.b16 %v399
    %v684 = vunpack.c.l.b16 %v400
    %v685 = vunpack.c.l.b16 %v401
    %v686 = vunpack.c.l.b16 %v402
    %v687 = vunpack.c.l.b16 %v403
    %v688 = vunpack.c.l.b16 %v404
    %v689 = vunpack.c.l.b16 %v405
    %v690 = vunpack.c.l.b16 %v406
    %v691 = vunpack.c.l.b16 %v407
    %v692 = vunpack.c.l.b16 %v408
    %v693 = vunpack.c.l.b16 %v409
    %v694 = vunpack.c.l.b16 %v410
    %v695 = vunpack.c.l.b16 %v411
    %v696 = vunpack.c.l.b16 %v412
    %v697 = vunpack.c.l.b16 %v413
    %v698 = vunpack.c.l.b16 %v414
    %v699 = vunpack.c.l.b16 %v415
    %v700 = vunpack.c.l.b16 %v416
    %v701 = vunpack.c.l.b16 %v417
    %v702 = vunpack.c.l.b16 %v418
    %v703 = vunpack.c.l.b16 %v419
    %v704 = vunpack.c.l.b16 %v420
    %v705 = vunpack.c.l.b16 %v421
    %v706 = vunpack.c.l.b16 %v422
    %v707 = vunpack.c.l.b16 %v423
    %v708 = vunpack.c.l.b16 %v424
    %v709 = vunpack.c.l.b16 %v425
    %v710 = vunpack.c.l.b16 %v426
    %v711 = vunpack.c.l.b16 %v427
    %v712 = vunpack.c.l.b16 %v428
    %v713 = vunpack.c.l.b16 %v429
    %v714 = vunpack.c.l.b16 %v430
    %v715 = vunpack.c.l.b16 %v431
    %v716 = vunpack.c.l.b16 %v432
    %v717 = vunpack.c.l.b16 %v433
    %v718 = vunpack.c.l.b16 %v434
    %v719 = vunpack.c.l.b16 %v435
    %v720 = vunpack.c.l.b16 %v436
    %v721 = vunpack.c.l.b16 %v437
    %v722 = vunpack.c.l.b16 %v438
    %v723 = vunpack.c.l.b16 %v439
    %v724 = vunpack.c.l.b16 %v440
    %v725 = vunpack.c.l.b16 %v441
    %v726 = vunpack.c.l.b16 %v442
    %v727 = vunpack.c.l.b16 %v443
    %v728 = vunpack.c.l.b16 %v444
    %v729 = vunpack.c.l.b16 %v445
    %v730 = vunpack.c.l.b16 %v446
    %v731 = vunpack.c.l.b16 %v447
    %v732 = vunpack.c.l.b16 %v448
    %v733 = vunpack.c.l.b16 %v449
    %v734 = vunpack.c.l.b16 %v450
    %v735 = vunpack.c.l.b16 %v451
    %v736 = vunpack.c.l.b16 %v452
    %v737 = vunpack.c.l.b16 %v453
    %v738 = vunpack.c.l.b16 %v454
    %v739 = vunpack.c.l.b16 %v455
    %v740 = vunpack.c.l.b16 %v456
    %v741 = vunpack.c.l.b16 %v457
    %v742 = vunpack.c.l.b16 %v458
    %v743 = vunpack.c.l.b16 %v459
    %v744 = vunpack.c.l.b16 %v460
    %v745 = vunpack.c.l.b16 %v461
    %v746 = vunpack.c.l.b16 %v462
    %v747 = vunpack.c.l.b16 %v463
    %v748 = vunpack.c.l.b16 %v464
    %v749 = vunpack.c.l.b16 %v465
    %v750 = vunpack.c.l.b16 %v466
    %v751 = vunpack.c.l.b16 %v467
    %v752 = vunpack.c.l.b16 %v468
    %v753 = vunpack.c.l.b16 %v469
    %v754 = vunpack.c.l.b16 %v470
    %v755 = vunpack.c.l.b16 %v471
    %v756 = vunpack.c.l.b16 %v472
    %v757 = vunpack.c.l.b16 %v473
    %v758 = vunpack.c.l.b16 %v474
    %v759 = vunpack.c.l.b16 %v475
    %v760 = vunpack.c.l.b16 %v476
    %v761 = vunpack.c.l.b16 %v477
    %v762 = vunpack.c.l.b16 %v478
    %v763 = vunpack.c.l.b16 %v479
    %v764 = vunpack.c.l.b16 %v480
    %v765 = vunpack.c.l.b16 %v481
    %v766 = vunpack.c.l.b16 %v482
    %v767 = vunpack.c.l.b16 %v483
    %v768 = vunpack.c.l.b16 %v484
    %v769 = vunpack.c.l.b16 %v485
    %v770 = vunpack.c.l.b16 %v486
    %v771 = vunpack.c.l.b16 %v487
    %v772 = vunpack.c.l.b16 %v488
    %v773 = vunpack.c.l.b16 %v489
    %v774 = vunpack.c.l.b16 %v490
    %v775 = vunpack.c.l.b16 %v491
    %v776 = vunpack.c.l.b16 %v492
    %v777 = vunpack.c.l.b16 %v493
    %v778 = vunpack.c.l.b16 %v494
    %v779 = vunpack.c.l.b16 %v495
    %v780 = vunpack.c.l.b16 %v496
    %v781 = vunpack.c.l.b16 %v497
    %v782 = vunpack.c.l.b16 %v498
    %v783 = vunpack.c.l.b16 %v499
    %v784 = vunpack.c.l.b16 %v500
    %v785 = vunpack.c.l.b16 %v501
    %v786 = vunpack.c.l.b16 %v502
    %v787 = vunpack.c.l.b16 %v503
    %v788 = vunpack.c.l.b16 %v504
    %v789 = vunpack.c.l.b16 %v505
    %v790 = vunpack.c.l.b16 %v506
    %v791 = vunpack.c.l.b16 %v507
    %v792 = vunpack.c.l.b16 %v508
    %v793 = vunpack.c.l.b16 %v509
    %v794 = vunpack.c.l.b16 %v510
    %v795 = vunpack.c.l.b16 %v511
    %v796 = vpack.c.b16 %v669, %v668
    %v797 = vpack.c.b16 %v671, %v670
    %v798 = vpack.c.b16 %v673, %v672
    %v799 = vpack.c.b16 %v675, %v674
    %v800 = vpack.c.b16 %v677, %v676
    %v801 = vpack.c.b16 %v679, %v678
    %v802 = vpack.c.b16 %v681, %v680
    %v803 = vpack.c.b16 %v683, %v682
    %v804 = vpack.c.b16 %v685, %v684
    %v805 = vpack.c.b16 %v687, %v686
    %v806 = vpack.c.b16 %v689, %v688
    %v807 = vpack.c.b16 %v691, %v690
    %v808 = vpack.c.b16 %v693, %v692
    %v809 = vpack.c.b16 %v695, %v694
    %v810 = vpack.c.b16 %v697, %v696
    %v811 = vpack.c.b16 %v699, %v698
    %v812 = vpack.c.b16 %v701, %v700
    %v813 = vpack.c.b16 %v703, %v702
    %v814 = vpack.c.b16 %v705, %v704
    %v815 = vpack.c.b16 %v707, %v706
    %v816 = vpack.c.b16 %v709, %v708
    %v817 = vpack.c.b16 %v711, %v710
    %v818 = vpack.c.b16 %v713, %v712
    %v819 = vpack.c.b16 %v715, %v714
    %v820 = vpack.c.b16 %v717, %v716
    %v821 = vpack.c.b16 %v719, %v718
    %v822 = vpack.c.b16 %v721, %v720
    %v823 = vpack.c.b16 %v723, %v722
    %v824 = vpack.c.b16 %v725, %v724
    %v825 = vpack.c.b16 %v727, %v726
    %v826 = vpack.c.b16 %v729, %v728
    %v827 = vpack.c.b16 %v731, %v730
    %v828 = vpack.c.b16 %v733, %v732
    %v829 = vpack.c.b16 %v735, %v734
    %v830 = vpack.c.b16 %v737, %v736
    %v831 = vpack.c.b16 %v739, %v738
    %v832 = vpack.c.b16 %v741, %v740
    %v833 = vpack.c.b16 %v743, %v742
    %v834 = vpack.c.b16 %v745, %v744
    %v835 = vpack.c.b16 %v747, %v746
    %v836 = vpack.c.b16 %v749, %v748
    %v837 = vpack.c.b16 %v751, %v750
    %v838 = vpack.c.b16 %v753, %v752
    %v839 = vpack.c.b16 %v755, %v754
    %v840 = vpack.c.b16 %v757, %v756
    %v841 = vpack.c.b16 %v759, %v758
    %v842 = vpack.c.b16 %v761, %v760
    %v843 = vpack.c.b16 %v763, %v762
    %v844 = vpack.c.b16 %v765, %v764
    %v845 = vpack.c.b16 %v767, %v766
    %v846 = vpack.c.b16 %v769, %v768
    %v847 = vpack.c.b16 %v771, %v770
    %v848 = vpack.c.b16 %v773, %v772
    %v849 = vpack.c.b16 %v775, %v774
    %v850 = vpack.c.b16 %v777, %v776
    %v851 = vpack.c.b16 %v779, %v778
    %v852 = vpack.c.b16 %v781, %v780
    %v853 = vpack.c.b16 %v783, %v782
    %v854 = vpack.c.b16 %v785, %v784
    %v855 = vpack.c.b16 %v787, %v786
    %v856 = vpack.c.b16 %v789, %v788
    %v857 = vpack.c.b16 %v791, %v790
    %v858 = vpack.c.b16 %v793, %v792
    %v859 = vpack.c.b16 %v795, %v794
    %924 = vmatprep.subr.bf16.mxu0 0
    %925 = vmatpush1.bf16.msra.mxu0 %v803
    %926 = vmatprep.subr.bf16.mxu0 0
    %927 = vmatpush1.bf16.msra.mxu0 %v802
    %928 = vmatprep.subr.bf16.mxu0 0
    %929 = vmatpush1.bf16.msra.mxu0 %v801
    %930 = vmatprep.subr.bf16.mxu0 0
    %931 = vmatpush1.bf16.msra.mxu0 %v800
    %932 = vmatprep.subr.bf16.mxu0 0
    %933 = vmatpush1.bf16.msra.mxu0 %v799
    %934 = vmatprep.subr.bf16.mxu0 0
    %935 = vmatpush1.bf16.msra.mxu0 %v798
    %936 = vmatprep.subr.bf16.mxu0 0
    %937 = vmatpush1.bf16.msra.mxu0 %v797
    %938 = vmatprep.subr.bf16.mxu0 0
    %939 = vmatpush1.bf16.msra.mxu0 %v796
    %940 = vmatprep.subr.bf16.mxu0 0
    %941 = vmatpush2.bf16.msra.mxu0 %v811
    %942 = vmatprep.subr.bf16.mxu0 0
    %943 = vmatpush2.bf16.msra.mxu0 %v810
    %944 = vmatprep.subr.bf16.mxu0 0
    %945 = vmatpush2.bf16.msra.mxu0 %v809
    %946 = vmatprep.subr.bf16.mxu0 0
    %947 = vmatpush2.bf16.msra.mxu0 %v808
    %948 = vmatprep.subr.bf16.mxu0 0
    %949 = vmatpush2.bf16.msra.mxu0 %v807
    %950 = vmatprep.subr.bf16.mxu0 0
    %951 = vmatpush2.bf16.msra.mxu0 %v806
    %952 = vmatprep.subr.bf16.mxu0 0
    %953 = vmatpush2.bf16.msra.mxu0 %v805
    %954 = vmatprep.subr.bf16.mxu0 0
    %955 = vmatpush2.bf16.msra.mxu0 %v804
    %956 = vmatprep.mubr.bf16.mxu0 %v525
    %957 = vmatmul.mubr.bf16.gmra.mxu0 %v524
    %v958 = vpop.f32.mrf.mxu0
    %v959 = vadd.f32 0.0, %v958
    %v960 = vpop.f32.mrf.mxu0
    %v961 = vpop.f32.mrf.mxu0
    %v962 = vpop.f32.mrf.mxu0
    %963 = vdwg.mxu0
    %964 = vmatprep.subr.bf16.mxu0 0
    %965 = vmatpush1.bf16.msra.mxu0 %v819
    %966 = vmatprep.subr.bf16.mxu0 0
    %967 = vmatpush1.bf16.msra.mxu0 %v818
    %968 = vmatprep.subr.bf16.mxu0 0
    %969 = vmatpush1.bf16.msra.mxu0 %v817
    %970 = vmatprep.subr.bf16.mxu0 0
    %971 = vmatpush1.bf16.msra.mxu0 %v816
    %972 = vmatprep.subr.bf16.mxu0 0
    %973 = vmatpush1.bf16.msra.mxu0 %v815
    %974 = vmatprep.subr.bf16.mxu0 0
    %975 = vmatpush1.bf16.msra.mxu0 %v814
    %976 = vmatprep.subr.bf16.mxu0 0
    %977 = vmatpush1.bf16.msra.mxu0 %v813
    %978 = vmatprep.subr.bf16.mxu0 0
    %979 = vmatpush1.bf16.msra.mxu0 %v812
    %980 = vmatprep.subr.bf16.mxu0 0
    %981 = vmatpush2.bf16.msra.mxu0 %v827
    %982 = vmatprep.subr.bf16.mxu0 0
    %983 = vmatpush2.bf16.msra.mxu0 %v826
    %984 = vmatprep.subr.bf16.mxu0 0
    %985 = vmatpush2.bf16.msra.mxu0 %v825
    %986 = vmatprep.subr.bf16.mxu0 0
    %987 = vmatpush2.bf16.msra.mxu0 %v824
    %988 = vmatprep.subr.bf16.mxu0 0
    %989 = vmatpush2.bf16.msra.mxu0 %v823
    %990 = vmatprep.subr.bf16.mxu0 0
    %991 = vmatpush2.bf16.msra.mxu0 %v822
    %992 = vmatprep.subr.bf16.mxu0 0
    %993 = vmatpush2.bf16.msra.mxu0 %v821
    %994 = vmatprep.subr.bf16.mxu0 0
    %995 = vmatpush2.bf16.msra.mxu0 %v820
    %996 = vmatprep.mubr.bf16.mxu0 %v527
    %997 = vmatmul.mubr.bf16.gmra.mxu0 %v526
    %v998 = vpop.f32.mrf.mxu0
    %v999 = vadd.f32 %v959, %v998
    %v1000 = vpop.f32.mrf.mxu0
    %v1001 = vpop.f32.mrf.mxu0
    %v1002 = vpop.f32.mrf.mxu0
    %1003 = vdwg.mxu0
    %1004 = vmatprep.subr.bf16.mxu0 0
    %1005 = vmatpush1.bf16.msra.mxu0 %v835
    %1006 = vmatprep.subr.bf16.mxu0 0
    %1007 = vmatpush1.bf16.msra.mxu0 %v834
    %1008 = vmatprep.subr.bf16.mxu0 0
    %1009 = vmatpush1.bf16.msra.mxu0 %v833
    %1010 = vmatprep.subr.bf16.mxu0 0
    %1011 = vmatpush1.bf16.msra.mxu0 %v832
    %1012 = vmatprep.subr.bf16.mxu0 0
    %1013 = vmatpush1.bf16.msra.mxu0 %v831
    %1014 = vmatprep.subr.bf16.mxu0 0
    %1015 = vmatpush1.bf16.msra.mxu0 %v830
    %1016 = vmatprep.subr.bf16.mxu0 0
    %1017 = vmatpush1.bf16.msra.mxu0 %v829
    %1018 = vmatprep.subr.bf16.mxu0 0
    %1019 = vmatpush1.bf16.msra.mxu0 %v828
    %1020 = vmatprep.subr.bf16.mxu0 0
    %1021 = vmatpush2.bf16.msra.mxu0 %v843
    %1022 = vmatprep.subr.bf16.mxu0 0
    %1023 = vmatpush2.bf16.msra.mxu0 %v842
    %1024 = vmatprep.subr.bf16.mxu0 0
    %1025 = vmatpush2.bf16.msra.mxu0 %v841
    %1026 = vmatprep.subr.bf16.mxu0 0
    %1027 = vmatpush2.bf16.msra.mxu0 %v840
    %1028 = vmatprep.subr.bf16.mxu0 0
    %1029 = vmatpush2.bf16.msra.mxu0 %v839
    %1030 = vmatprep.subr.bf16.mxu0 0
    %1031 = vmatpush2.bf16.msra.mxu0 %v838
    %1032 = vmatprep.subr.bf16.mxu0 0
    %1033 = vmatpush2.bf16.msra.mxu0 %v837
    %1034 = vmatprep.subr.bf16.mxu0 0
    %1035 = vmatpush2.bf16.msra.mxu0 %v836
    %1036 = vmatprep.mubr.bf16.mxu0 %v529
    %1037 = vmatmul.mubr.bf16.gmra.mxu0 %v528
    %v1038 = vpop.f32.mrf.mxu0
    %v1039 = vadd.f32 %v999, %v1038
    %v1040 = vpop.f32.mrf.mxu0
    %v1041 = vpop.f32.mrf.mxu0
    %v1042 = vpop.f32.mrf.mxu0
    %1043 = vdwg.mxu0
    %1044 = vmatprep.subr.bf16.mxu0 0
    %1045 = vmatpush1.bf16.msra.mxu0 %v851
    %1046 = vmatprep.subr.bf16.mxu0 0
    %1047 = vmatpush1.bf16.msra.mxu0 %v850
    %1048 = vmatprep.subr.bf16.mxu0 0
    %1049 = vmatpush1.bf16.msra.mxu0 %v849
    %1050 = vmatprep.subr.bf16.mxu0 0
    %1051 = vmatpush1.bf16.msra.mxu0 %v848
    %1052 = vmatprep.subr.bf16.mxu0 0
    %1053 = vmatpush1.bf16.msra.mxu0 %v847
    %1054 = vmatprep.subr.bf16.mxu0 0
    %1055 = vmatpush1.bf16.msra.mxu0 %v846
    %1056 = vmatprep.subr.bf16.mxu0 0
    %1057 = vmatpush1.bf16.msra.mxu0 %v845
    %1058 = vmatprep.subr.bf16.mxu0 0
    %1059 = vmatpush1.bf16.msra.mxu0 %v844
    %1060 = vmatprep.subr.bf16.mxu0 0
    %1061 = vmatpush2.bf16.msra.mxu0 %v859
    %1062 = vmatprep.subr.bf16.mxu0 0
    %1063 = vmatpush2.bf16.msra.mxu0 %v858
    %1064 = vmatprep.subr.bf16.mxu0 0
    %1065 = vmatpush2.bf16.msra.mxu0 %v857
    %1066 = vmatprep.subr.bf16.mxu0 0
    %1067 = vmatpush2.bf16.msra.mxu0 %v856
    %1068 = vmatprep.subr.bf16.mxu0 0
    %1069 = vmatpush2.bf16.msra.mxu0 %v855
    %1070 = vmatprep.subr.bf16.mxu0 0
    %1071 = vmatpush2.bf16.msra.mxu0 %v854
    %1072 = vmatprep.subr.bf16.mxu0 0
    %1073 = vmatpush2.bf16.msra.mxu0 %v853
    %1074 = vmatprep.subr.bf16.mxu0 0
    %1075 = vmatpush2.bf16.msra.mxu0 %v852
    %1076 = vmatprep.mubr.bf16.mxu0 %v531
    %1077 = vmatmul.mubr.bf16.gmra.mxu0 %v530
    %v1078 = vpop.f32.mrf.mxu0
    %v1079 = vadd.f32 %v1039, %v1078
    %v1080 = vpop.f32.mrf.mxu0
    %v1081 = vpop.f32.mrf.mxu0
    %v1082 = vpop.f32.mrf.mxu0
    %1083 = vdwg.mxu0
    %v1088 = vunpack.c.l.b16 %v376
    %v1089 = vunpack.c.l.b16 %v377
    %v1090 = vunpack.c.l.b16 %v378
    %v1091 = vunpack.c.l.b16 %v379
    %v1092 = vpack.c.b16 %v1089, %v1088
    %v1093 = vpack.c.b16 %v1091, %v1090
    %vm1096 = vcmask 261120
    %v1098 = vsel %vm1096, %v375, 0
    %1100 = vmatprep.subr.bf16.mxu0 0
    %1101 = vmatpush1.bf16.msra.mxu0 0
    %1102 = vmatprep.subr.bf16.mxu0 0
    %1103 = vmatpush1.bf16.msra.mxu0 0
    %1104 = vmatprep.subr.bf16.mxu0 0
    %1105 = vmatpush1.bf16.msra.mxu0 0
    %1106 = vmatprep.subr.bf16.mxu0 0
    %1107 = vmatpush1.bf16.msra.mxu0 0
    %1108 = vmatprep.subr.bf16.mxu0 0
    %1109 = vmatpush1.bf16.msra.mxu0 0
    %1110 = vmatprep.subr.bf16.mxu0 0
    %1111 = vmatpush1.bf16.msra.mxu0 0
    %1112 = vmatprep.subr.bf16.mxu0 0
    %1113 = vmatpush1.bf16.msra.mxu0 %v1093
    %1114 = vmatprep.subr.bf16.mxu0 0
    %1115 = vmatpush1.bf16.msra.mxu0 %v1092
    %1116 = vmatprep.subr.bf16.mxu0 0
    %1117 = vmatpush2.bf16.msra.mxu0 0
    %1118 = vmatprep.subr.bf16.mxu0 0
    %1119 = vmatpush2.bf16.msra.mxu0 0
    %1120 = vmatprep.subr.bf16.mxu0 0
    %1121 = vmatpush2.bf16.msra.mxu0 0
    %1122 = vmatprep.subr.bf16.mxu0 0
    %1123 = vmatpush2.bf16.msra.mxu0 0
    %1124 = vmatprep.subr.bf16.mxu0 0
    %1125 = vmatpush2.bf16.msra.mxu0 0
    %1126 = vmatprep.subr.bf16.mxu0 0
    %1127 = vmatpush2.bf16.msra.mxu0 0
    %1128 = vmatprep.subr.bf16.mxu0 0
    %1129 = vmatpush2.bf16.msra.mxu0 0
    %1130 = vmatprep.subr.bf16.mxu0 0
    %1131 = vmatpush2.bf16.msra.mxu0 0
    %1132 = vmatprep.mubr.bf16.mxu0 0
    %1133 = vmatmul.mubr.bf16.gmra.mxu0 %v1098
    %v1134 = vpop.f32.mrf.mxu0
    %v1135 = vadd.f32 %v1079, %v1134
    %v1136 = vpop.f32.mrf.mxu0
    %v1137 = vpop.f32.mrf.mxu0
    %v1138 = vpop.f32.mrf.mxu0
    %1139 = vdwg.mxu0
    %v1140 = vld [vmem:[%s8] sm:$0x1]
    %v1142 = vlaneseq
    %v1143 = vshrl.u32 %v1142, 7
    %v1144 = vsub.s32 0, %v1143
    %v1145 = vrot.slane %v1140, %v1144
    %v1147 = vadd.f32 %v1135, %v1145
    %1148 = vst.msk [vmem:[#allocation2] sm:$0xff] %vm1096, %v1147
    // Predicated region
    $region38: #{tpu_custom_call.1} parent=1 // pred_check
      _
    $region39: #{tpu_custom_call.1} parent=1 // pred_check_branch
      %1150 = sbr.rel (0) target = $region41
    $region40: #{tpu_custom_call.1} parent=1 // pred_region
      %s1152 = ssub.s32 128, 128
      %1153 = vsyncadd [#allocation3], %s1152
      %s1155 = sshll.u32 [#allocation2], 4
      %s1156 = int_to_ptr.vmem [resolvable:$true] %s1155
      %1158 = dma.vmem_to_hbm [thread:$0]  %s1156, 128, %s9, [#allocation3]
    $region41: #{tpu_custom_call.1} parent=1 // pred_fallthru
      _
    // Predicated region
    $region42: #{tpu_custom_call.1} parent=1 // pred_check
      _
    $region43: #{tpu_custom_call.1} parent=1 // pred_check_branch
      %1160 = sbr.rel (0) target = $region45
    $region44: #{tpu_custom_call.1} parent=1 // pred_region
      %1161 = dma.done [#allocation3], 128
    $region45: #{tpu_custom_call.1} parent=1 // pred_fallthru
      _
    %1162 = vsyncpa [#allocation3], 1

</llo_original>
